<compile_context>
chip_gen: v7x
topology: tpu7x:2x2x1
jax: 0.10.0
libtpu: 0.0.40
codegen_flags: <defaults>
</compile_context>

<pallas_src>
import jax
import jax.numpy as jnp
from jax.experimental import pallas as pl
from jax.experimental.pallas import tpu as pltpu

_MIB = 1024 * 1024


def _round_up(x, m):
    return ((x + m - 1) // m) * m


def _sublane_multiple(dtype):
    return {4: 8, 2: 16, 1: 32}.get(jnp.dtype(dtype).itemsize, 8)


def _hw_params():
    """Returns (lane_alignment, vmem_budget_bytes), with conservative fallbacks."""
    align = 128
    vmem_cap = 64 * _MIB                       # conservative: v7x per-TC VMEM
    try:
        kind = jax.devices()[0].device_kind.lower()
        # v6e / v7x MXUs are 2x256x256 -> prefer 256-aligned contraction/output
        if not any(t in kind for t in ("v2", "v3", "v4", "v5")):
            align = 256
    except Exception:
        pass
    try:
        vmem_cap = int(pltpu.get_tpu_info().vmem_capacity_bytes)
    except Exception:
        pass
    budget = vmem_cap * 3 // 4                 # leave headroom for compiler scratch
    return align, budget


# --------------------------------------------------------------------------
# Kernels
# --------------------------------------------------------------------------
def _ffn_single_pass_kernel(x_ref, w1_ref, b1_ref, w2_ref, b2_ref, o_ref):
    # Weights resident: full d_ff in one pass, no accumulator scratch needed.
    h = jnp.dot(x_ref[...], w1_ref[...], preferred_element_type=jnp.float32)
    h = jnp.maximum(h + b1_ref[...], 0.0)          # ReLU (dropout = identity)
    y = jnp.dot(h.astype(w2_ref.dtype), w2_ref[...],
                preferred_element_type=jnp.float32)
    o_ref[...] = (y + b2_ref[...]).astype(o_ref.dtype)


def _ffn_chunked_kernel(x_ref, w1_ref, b1_ref, w2_ref, b2_ref, o_ref, acc_ref):
    # Fallback: d_ff split into chunks along grid axis 1 (reduction axis, last).
    j = pl.program_id(1)

    @pl.when(j == 0)
    def _():
        acc_ref[...] = jnp.zeros_like(acc_ref)

    h = jnp.dot(x_ref[...], w1_ref[...], preferred_element_type=jnp.float32)
    h = jnp.maximum(h + b1_ref[...], 0.0)          # ReLU (dropout = identity)
    acc_ref[...] += jnp.dot(h.astype(w2_ref.dtype), w2_ref[...],
                            preferred_element_type=jnp.float32)

    @pl.when(j == pl.num_programs(1) - 1)
    def _():
        o_ref[...] = (acc_ref[...] + b2_ref[...]).astype(o_ref.dtype)


# --------------------------------------------------------------------------
# Wrapper
# --------------------------------------------------------------------------
def positionwise_feed_forward(x, w1, b1, w2, b2, *, tm=256, tf=2048,
                              force_chunked=False):
    """x: (B, S, d_model). w1: (d_model, d_ff), b1: (d_ff,),
       w2: (d_ff, d_model), b2: (d_model,). Returns (B, S, d_model)."""
    B, S, d_model = x.shape
    d_ff = w1.shape[1]
    M = B * S

    align, vmem_budget = _hw_params()

    x_it = jnp.dtype(x.dtype).itemsize
    w_it = jnp.dtype(w1.dtype).itemsize
    o_it = x_it

    # Row tile: dtype-aware sublane rounding; shrinks automatically for tiny M.
    sub = _sublane_multiple(x.dtype)
    tm = _round_up(max(sub, min(tm, _round_up(M, sub))), sub)
    M_p = _round_up(M, tm)

    d_model_p = _round_up(d_model, align)

    def pad2(a, r, c):
        pr, pc = r - a.shape[0], c - a.shape[1]
        if pr == 0 and pc == 0:
            return a
        return jnp.pad(a, ((0, pr), (0, pc)))

    # NOTE: for production use, pad W1/W2/b1/b2 once at parameter-setup time.
    x2d = pad2(x.reshape(M, d_model), M_p, d_model_p)
    b2p = pad2(b2.reshape(1, d_model), 1, d_model_p)

    # --- weights-resident decision (counts double-buffered allocations) ---
    d_ff_r = _round_up(d_ff, align)
    weight_bytes = ((d_model_p * d_ff_r + d_ff_r * d_model_p) * w_it
                    + (d_ff_r + d_model_p) * w_it)
    row_tile_bytes = 2 * tm * d_model_p * (x_it + o_it)   # 2x-buffered x / out tiles
    resident_need = 2 * weight_bytes + row_tile_bytes + 2 * _MIB
    resident = (not force_chunked) and (resident_need <= vmem_budget)

    if resident:
        # ---------------- weights-resident, single-pass path ----------------
        d_ff_p = d_ff_r
        w1p = pad2(w1, d_model_p, d_ff_p)
        b1p = pad2(b1.reshape(1, d_ff), 1, d_ff_p)
        w2p = pad2(w2, d_ff_p, d_model_p)

        cost = pl.CostEstimate(
            flops=4 * M_p * d_model_p * d_ff_p,
            transcendentals=0,
            bytes_accessed=int(x2d.size * x_it
                               + (w1p.size + w2p.size + b1p.size + b2p.size) * w_it
                               + M_p * d_model_p * o_it),
        )

        out2d = pl.pallas_call(
            _ffn_single_pass_kernel,
            out_shape=jax.ShapeDtypeStruct((M_p, d_model_p), x.dtype),
            grid_spec=pltpu.PrefetchScalarGridSpec(
                num_scalar_prefetch=0,
                grid=(M_p // tm,),
                in_specs=[
                    pl.BlockSpec((tm, d_model_p),      lambda i: (i, 0)),  # x rows
                    pl.BlockSpec((d_model_p, d_ff_p),  lambda i: (0, 0)),  # W1 (resident)
                    pl.BlockSpec((1, d_ff_p),          lambda i: (0, 0)),  # b1
                    pl.BlockSpec((d_ff_p, d_model_p),  lambda i: (0, 0)),  # W2 (resident)
                    pl.BlockSpec((1, d_model_p),       lambda i: (0, 0)),  # b2
                ],
                out_specs=pl.BlockSpec((tm, d_model_p), lambda i: (i, 0)),
            ),
            compiler_params=pltpu.CompilerParams(
                dimension_semantics=("parallel",),
                vmem_limit_bytes=int(vmem_budget),
            ),
            cost_estimate=cost,
        )(x2d, w1p, b1p, w2p, b2p)

    else:
        # ---------------- chunked d_ff reduction fallback -------------------
        tf = _round_up(max(align, min(tf, _round_up(d_ff, align))), align)

        def chunk_need(tf_):
            wchunk = 2 * d_model_p * tf_ * w_it + (tf_ + d_model_p) * w_it
            acc = tm * d_model_p * 4
            return 2 * wchunk + row_tile_bytes + acc + 2 * _MIB

        while tf > align and chunk_need(tf) > vmem_budget:
            tf = max(align, _round_up(tf // 2, align))

        d_ff_p = _round_up(d_ff, tf)
        n_chunks = d_ff_p // tf
        n_row_tiles = M_p // tm

        w1p = pad2(w1, d_model_p, d_ff_p)
        b1p = pad2(b1.reshape(1, d_ff), 1, d_ff_p)
        w2p = pad2(w2, d_ff_p, d_model_p)

        cost = pl.CostEstimate(
            flops=4 * M_p * d_model_p * d_ff_p,
            transcendentals=0,
            bytes_accessed=int(x2d.size * x_it
                               + n_row_tiles * (w1p.size + w2p.size + b1p.size) * w_it
                               + b2p.size * w_it + M_p * d_model_p * o_it),
        )

        out2d = pl.pallas_call(
            _ffn_chunked_kernel,
            out_shape=jax.ShapeDtypeStruct((M_p, d_model_p), x.dtype),
            grid_spec=pltpu.PrefetchScalarGridSpec(
                num_scalar_prefetch=0,
                grid=(n_row_tiles, n_chunks),   # rows (parallel), d_ff chunks (reduction, last)
                in_specs=[
                    pl.BlockSpec((tm, d_model_p), lambda i, j: (i, 0)),   # x rows
                    pl.BlockSpec((d_model_p, tf), lambda i, j: (0, j)),   # W1 chunk
                    pl.BlockSpec((1, tf),         lambda i, j: (0, j)),   # b1 chunk
                    pl.BlockSpec((tf, d_model_p), lambda i, j: (j, 0)),   # W2 chunk
                    pl.BlockSpec((1, d_model_p),  lambda i, j: (0, 0)),   # b2
                ],
                # same output block across the d_ff axis -> resident accumulator
                out_specs=pl.BlockSpec((tm, d_model_p), lambda i, j: (i, 0)),
                scratch_shapes=[pltpu.VMEM((tm, d_model_p), jnp.float32)],
            ),
            compiler_params=pltpu.CompilerParams(
                dimension_semantics=("parallel", "arbitrary"),
                vmem_limit_bytes=int(vmem_budget),
            ),
            cost_estimate=cost,
        )(x2d, w1p, b1p, w2p, b2p)

    return out2d[:M, :d_model].reshape(B, S, d_model)


if __name__ == "__main__":
    key = jax.random.PRNGKey(0)

    def ref_ffn(x, w1, b1, w2, b2):
        h = jnp.maximum(jnp.dot(x, w1, precision="highest") + b1, 0.0)
        return jnp.dot(h, w2, precision="highest") + b2

    # --- test 1: weights-resident single-pass path (default) --------------
    B, S, d_model, d_ff = 2, 8, 32, 64
    k = jax.random.split(key, 10)
    x = jax.random.normal(k[0], (B, S, d_model), dtype=jnp.float32)
    w1 = jax.random.normal(k[1], (d_model, d_ff), dtype=jnp.float32) * 0.05
    b1 = jax.random.normal(k[2], (d_ff,), dtype=jnp.float32) * 0.05
    w2 = jax.random.normal(k[3], (d_ff, d_model), dtype=jnp.float32) * 0.05
    b2 = jax.random.normal(k[4], (d_model,), dtype=jnp.float32) * 0.05

    y = positionwise_feed_forward(x, w1, b1, w2, b2)
    jax.block_until_ready(y)
    assert y.shape == (B, S, d_model)
    assert jnp.allclose(y, ref_ffn(x, w1, b1, w2, b2), atol=2e-4, rtol=2e-4)

    # --- test 2: chunked d_ff reduction fallback path ----------------------
    B2, S2, dm2, dff2 = 2, 16, 64, 512
    x2 = jax.random.normal(k[5], (B2, S2, dm2), dtype=jnp.float32)
    w1b = jax.random.normal(k[6], (dm2, dff2), dtype=jnp.float32) * 0.05
    b1b = jax.random.normal(k[7], (dff2,), dtype=jnp.float32) * 0.05
    w2b = jax.random.normal(k[8], (dff2, dm2), dtype=jnp.float32) * 0.05
    b2b = jax.random.normal(k[9], (dm2,), dtype=jnp.float32) * 0.05

    y2 = positionwise_feed_forward(x2, w1b, b1b, w2b, b2b, tf=256,
                                   force_chunked=True)
    jax.block_until_ready(y2)
    assert y2.shape == (B2, S2, dm2)
    assert jnp.allclose(y2, ref_ffn(x2, w1b, b1b, w2b, b2b), atol=2e-4, rtol=2e-4)

    print("KERNEL_OK")
</pallas_src>

<mosaic_0001>
module attributes {stable_mosaic.version = 11 : i64} {
  func.func @_ffn_single_pass_kernel(%arg0: i32, %arg1: memref<16x256xf32, #tpu.memory_space<vmem>>, %arg2: memref<256x256xf32, #tpu.memory_space<vmem>>, %arg3: memref<1x256xf32, #tpu.memory_space<vmem>>, %arg4: memref<256x256xf32, #tpu.memory_space<vmem>>, %arg5: memref<1x256xf32, #tpu.memory_space<vmem>>, %arg6: memref<16x256xf32, #tpu.memory_space<vmem>>) attributes {dimension_semantics = [#tpu.dimension_semantics<parallel>], iteration_bounds = array<i64: 1>, scalar_prefetch = 0 : i64, scratch_operands = 0 : i64, tpu.core_type = #tpu.core_type<tc>, window_params = [{transform_indices = @transform_0, window_bounds = array<i64: 16, 256>}, {pipeline_mode = #tpu.pipeline_mode<synchronous>, transform_indices = @transform_1, window_bounds = array<i64: 256, 256>}, {pipeline_mode = #tpu.pipeline_mode<synchronous>, transform_indices = @transform_2, window_bounds = array<i64: 1, 256>}, {pipeline_mode = #tpu.pipeline_mode<synchronous>, transform_indices = @transform_3, window_bounds = array<i64: 256, 256>}, {pipeline_mode = #tpu.pipeline_mode<synchronous>, transform_indices = @transform_4, window_bounds = array<i64: 1, 256>}, {transform_indices = @transform_5, window_bounds = array<i64: 16, 256>}]} {
    %c0 = arith.constant 0 : index
    %c0_0 = arith.constant 0 : index
    %0 = vector.load %arg1[%c0, %c0_0] : memref<16x256xf32, #tpu.memory_space<vmem>>, vector<16x256xf32>
    %c0_1 = arith.constant 0 : index
    %c0_2 = arith.constant 0 : index
    %1 = vector.load %arg2[%c0_1, %c0_2] : memref<256x256xf32, #tpu.memory_space<vmem>>, vector<256x256xf32>
    %cst = arith.constant dense<0.000000e+00> : vector<16x256xf32>
    %2 = tpu.matmul %0, %1, %cst {dimension_numbers = #tpu.dot_dimension_numbers<[1], [0], [0], [1], [0, 0, 1, 1], [], []>} : vector<16x256xf32>, vector<256x256xf32>, vector<16x256xf32> -> vector<16x256xf32>
    %c0_3 = arith.constant 0 : index
    %c0_4 = arith.constant 0 : index
    %3 = vector.load %arg3[%c0_3, %c0_4] : memref<1x256xf32, #tpu.memory_space<vmem>>, vector<1x256xf32>
    %4 = vector.broadcast %3 : vector<1x256xf32> to vector<16x256xf32>
    %5 = arith.addf %2, %4 : vector<16x256xf32>
    %cst_5 = arith.constant 0.000000e+00 : f32
    %6 = vector.broadcast %cst_5 : f32 to vector<16x256xf32>
    %7 = arith.maximumf %5, %6 : vector<16x256xf32>
    %c0_6 = arith.constant 0 : index
    %c0_7 = arith.constant 0 : index
    %8 = vector.load %arg4[%c0_6, %c0_7] : memref<256x256xf32, #tpu.memory_space<vmem>>, vector<256x256xf32>
    %cst_8 = arith.constant dense<0.000000e+00> : vector<16x256xf32>
    %9 = tpu.matmul %7, %8, %cst_8 {dimension_numbers = #tpu.dot_dimension_numbers<[1], [0], [0], [1], [0, 0, 1, 1], [], []>} : vector<16x256xf32>, vector<256x256xf32>, vector<16x256xf32> -> vector<16x256xf32>
    %c0_9 = arith.constant 0 : index
    %c0_10 = arith.constant 0 : index
    %10 = vector.load %arg5[%c0_9, %c0_10] : memref<1x256xf32, #tpu.memory_space<vmem>>, vector<1x256xf32>
    %11 = vector.broadcast %10 : vector<1x256xf32> to vector<16x256xf32>
    %12 = arith.addf %9, %11 : vector<16x256xf32>
    %c0_11 = arith.constant 0 : index
    %c0_12 = arith.constant 0 : index
    %13 = vector.load %arg6[%c0_11, %c0_12] : memref<16x256xf32, #tpu.memory_space<vmem>>, vector<16x256xf32>
    tpu.vector_store %arg6[%c0_11, %c0_12], %12 {strides = array<i32>} : memref<16x256xf32, #tpu.memory_space<vmem>>, vector<16x256xf32>,
    return
  }
  func.func @transform_0(%arg0: i32) -> (i32, i32) {
    %c0_i32 = arith.constant 0 : i32
    %c0_i32_0 = arith.constant 0 : i32
    return %arg0, %c0_i32 : i32, i32
  }
  func.func @transform_1(%arg0: i32) -> (i32, i32) {
    %c0_i32 = arith.constant 0 : i32
    %c0_i32_0 = arith.constant 0 : i32
    %c0_i32_1 = arith.constant 0 : i32
    return %c0_i32, %c0_i32_0 : i32, i32
  }
  func.func @transform_2(%arg0: i32) -> (i32, i32) {
    %c0_i32 = arith.constant 0 : i32
    %c0_i32_0 = arith.constant 0 : i32
    %c0_i32_1 = arith.constant 0 : i32
    return %c0_i32, %c0_i32_0 : i32, i32
  }
  func.func @transform_3(%arg0: i32) -> (i32, i32) {
    %c0_i32 = arith.constant 0 : i32
    %c0_i32_0 = arith.constant 0 : i32
    %c0_i32_1 = arith.constant 0 : i32
    return %c0_i32, %c0_i32_0 : i32, i32
  }
  func.func @transform_4(%arg0: i32) -> (i32, i32) {
    %c0_i32 = arith.constant 0 : i32
    %c0_i32_0 = arith.constant 0 : i32
    %c0_i32_1 = arith.constant 0 : i32
    return %c0_i32, %c0_i32_0 : i32, i32
  }
  func.func @transform_5(%arg0: i32) -> (i32, i32) {
    %c0_i32 = arith.constant 0 : i32
    %c0_i32_0 = arith.constant 0 : i32
    return %arg0, %c0_i32 : i32, i32
  }
}

</mosaic_0001>

<llo_original>
// kernel: tpu_custom_call.1
$region0: #{tpu_custom_call.1}
  #allocation0 [shape = 'u32[]', space=smem, size = 0x4, offset = 0x4, fixed_abs, tag = 'smem constant byte address 0x4 - core index']
  #allocation1 [shape = 'u32[144,128]{1,0:T(1,128)}', space=vmem, size = 0x12000, scoped, tag = 'internal scratch']
  %s0 = inlined_call_operand.hbm [shape: f32[16,256], index: 0, kind: input, shape index: {}]
  %s1 = inlined_call_operand.hbm [shape: f32[256,256], index: 1, kind: input, shape index: {}]
  %s2 = inlined_call_operand.vmem [shape: f32[1,256], index: 2, kind: input, shape index: {}]
  %s3 = inlined_call_operand.hbm [shape: f32[256,256], index: 3, kind: input, shape index: {}]
  %s4 = inlined_call_operand.vmem [shape: f32[1,256], index: 4, kind: input, shape index: {}]
  %s5 = inlined_call_operand.hbm [shape: f32[16,256], index: 5, kind: output, shape index: {}]
  %s6 = sld [smem:[#allocation0]]
  $region42: #{tpu_custom_call.1} parent=0
    _
  %s8 = ssub.s32 1, %s6
  %s9 = scalar_select 0, %s8, %s6
  $region1: #{tpu_custom_call.1} parent=0
    #allocation2 [shape = 'u8[16384]{0}', space=vmem, size = 0x4000, scoped, tag = 'input window, operand 0, single buffered']
    #allocation3 [shape = 's32[1]{0}', space=sflag, size = 0x4, scoped, tag = 'scoped memory for tpu_custom_call.1']
    #allocation4 [shape = 's32[1]{0}', space=sflag, size = 0x4, scoped, tag = 'scoped memory for tpu_custom_call.1']
    #allocation5 [shape = 'u8[262144]{0}', space=vmem, size = 0x40000, scoped, tag = 'input window, operand 1, single buffered']
    #allocation6 [shape = 's32[1]{0}', space=sflag, size = 0x4, scoped, tag = 'scoped memory for tpu_custom_call.1']
    #allocation7 [shape = 'u8[262144]{0}', space=vmem, size = 0x40000, scoped, tag = 'input window, operand 3, single buffered']
    #allocation8 [shape = 'u8[16384]{0}', space=vmem, size = 0x4000, scoped, tag = 'output window, operand 0, single buffered']
    %10 = vsyncpa [#allocation3], 0
    %11 = vsyncpa [#allocation6], 0
    %12 = vsyncpa [#allocation4], 0
    // Predicated region
    $region2: #{tpu_custom_call.1} parent=1 // pred_check
      _
    $region3: #{tpu_custom_call.1} parent=1 // pred_check_branch
      %14 = sbr.rel (0) target = $region5
    $region4: #{tpu_custom_call.1} parent=1 // pred_region
      %s16 = ssub.s32 512, 512
      %17 = vsyncadd [#allocation3], %s16
      %s18 = sshll.u32 [#allocation2], 4
      %s19 = int_to_ptr.vmem [resolvable:$true] %s18
      %24 = dma.hbm_to_vmem [thread:$0]  %s0, 512, %s19, [#allocation3], 256, 256, 16
    $region5: #{tpu_custom_call.1} parent=1 // pred_fallthru
      _
    // Predicated region
    $region6: #{tpu_custom_call.1} parent=1 // pred_check
      _
    $region7: #{tpu_custom_call.1} parent=1 // pred_check_branch
      %26 = sbr.rel (0) target = $region9
    $region8: #{tpu_custom_call.1} parent=1 // pred_region
      %s28 = ssub.s32 8192, 8192
      %29 = vsyncadd [#allocation6], %s28
      %s30 = sshll.u32 [#allocation5], 4
      %s31 = int_to_ptr.vmem [resolvable:$true] %s30
      %36 = dma.hbm_to_vmem [thread:$0]  %s1, 8192, %s31, [#allocation6], 256, 256, 16
    $region9: #{tpu_custom_call.1} parent=1 // pred_fallthru
      _
    // Predicated region
    $region10: #{tpu_custom_call.1} parent=1 // pred_check
      _
    $region11: #{tpu_custom_call.1} parent=1 // pred_check_branch
      %38 = sbr.rel (0) target = $region13
    $region12: #{tpu_custom_call.1} parent=1 // pred_region
      _
    $region13: #{tpu_custom_call.1} parent=1 // pred_fallthru
      _
    // Predicated region
    $region14: #{tpu_custom_call.1} parent=1 // pred_check
      _
    $region15: #{tpu_custom_call.1} parent=1 // pred_check_branch
      %40 = sbr.rel (0) target = $region17
    $region16: #{tpu_custom_call.1} parent=1 // pred_region
      %s42 = ssub.s32 8192, 8192
      %43 = vsyncadd [#allocation6], %s42
      %s44 = sshll.u32 [#allocation7], 4
      %s45 = int_to_ptr.vmem [resolvable:$true] %s44
      %50 = dma.hbm_to_vmem [thread:$0]  %s3, 8192, %s45, [#allocation6], 256, 256, 16
    $region17: #{tpu_custom_call.1} parent=1 // pred_fallthru
      _
    // Predicated region
    $region18: #{tpu_custom_call.1} parent=1 // pred_check
      _
    $region19: #{tpu_custom_call.1} parent=1 // pred_check_branch
      %52 = sbr.rel (0) target = $region21
    $region20: #{tpu_custom_call.1} parent=1 // pred_region
      _
    $region21: #{tpu_custom_call.1} parent=1 // pred_fallthru
      _
    // Predicated region
    $region22: #{tpu_custom_call.1} parent=1 // pred_check
      _
    $region23: #{tpu_custom_call.1} parent=1 // pred_check_branch
      %54 = sbr.rel (0) target = $region25
    $region24: #{tpu_custom_call.1} parent=1 // pred_region
      %55 = dma.done [#allocation3], 512
    $region25: #{tpu_custom_call.1} parent=1 // pred_fallthru
      _
    // Predicated region
    $region26: #{tpu_custom_call.1} parent=1 // pred_check
      _
    $region27: #{tpu_custom_call.1} parent=1 // pred_check_branch
      %57 = sbr.rel (0) target = $region29
    $region28: #{tpu_custom_call.1} parent=1 // pred_region
      %58 = dma.done [#allocation6], 8192
    $region29: #{tpu_custom_call.1} parent=1 // pred_fallthru
      _
    // Predicated region
    $region30: #{tpu_custom_call.1} parent=1 // pred_check
      _
    $region31: #{tpu_custom_call.1} parent=1 // pred_check_branch
      %60 = sbr.rel (0) target = $region33
    $region32: #{tpu_custom_call.1} parent=1 // pred_region
      %61 = dma.done [#allocation6], 8192
    $region33: #{tpu_custom_call.1} parent=1 // pred_fallthru
      _
    %v62 = vld [vmem:[#allocation2] sm:$0xff]
    %v63 = vld [vmem:[#allocation2 + $0x8] sm:$0xff]
    %v64 = vld [vmem:[#allocation2 + $0x10] sm:$0xff]
    %v65 = vld [vmem:[#allocation2 + $0x18] sm:$0xff]
    %v66 = vld [vmem:[#allocation5] sm:$0xff]
    %v67 = vld [vmem:[#allocation5 + $0x8] sm:$0xff]
    %v68 = vld [vmem:[#allocation5 + $0x10] sm:$0xff]
    %v69 = vld [vmem:[#allocation5 + $0x18] sm:$0xff]
    %v70 = vld [vmem:[#allocation5 + $0x20] sm:$0xff]
    %v71 = vld [vmem:[#allocation5 + $0x28] sm:$0xff]
    %v72 = vld [vmem:[#allocation5 + $0x30] sm:$0xff]
    %v73 = vld [vmem:[#allocation5 + $0x38] sm:$0xff]
    %v74 = vld [vmem:[#allocation5 + $0x40] sm:$0xff]
    %v75 = vld [vmem:[#allocation5 + $0x48] sm:$0xff]
    %v76 = vld [vmem:[#allocation5 + $0x50] sm:$0xff]
    %v77 = vld [vmem:[#allocation5 + $0x58] sm:$0xff]
    %v78 = vld [vmem:[#allocation5 + $0x60] sm:$0xff]
    %v79 = vld [vmem:[#allocation5 + $0x68] sm:$0xff]
    %v80 = vld [vmem:[#allocation5 + $0x70] sm:$0xff]
    %v81 = vld [vmem:[#allocation5 + $0x78] sm:$0xff]
    %v82 = vld [vmem:[#allocation5 + $0x80] sm:$0xff]
    %v83 = vld [vmem:[#allocation5 + $0x88] sm:$0xff]
    %v84 = vld [vmem:[#allocation5 + $0x90] sm:$0xff]
    %v85 = vld [vmem:[#allocation5 + $0x98] sm:$0xff]
    %v86 = vld [vmem:[#allocation5 + $0xa0] sm:$0xff]
    %v87 = vld [vmem:[#allocation5 + $0xa8] sm:$0xff]
    %v88 = vld [vmem:[#allocation5 + $0xb0] sm:$0xff]
    %v89 = vld [vmem:[#allocation5 + $0xb8] sm:$0xff]
    %v90 = vld [vmem:[#allocation5 + $0xc0] sm:$0xff]
    %v91 = vld [vmem:[#allocation5 + $0xc8] sm:$0xff]
    %v92 = vld [vmem:[#allocation5 + $0xd0] sm:$0xff]
    %v93 = vld [vmem:[#allocation5 + $0xd8] sm:$0xff]
    %v94 = vld [vmem:[#allocation5 + $0xe0] sm:$0xff]
    %v95 = vld [vmem:[#allocation5 + $0xe8] sm:$0xff]
    %v96 = vld [vmem:[#allocation5 + $0xf0] sm:$0xff]
    %v97 = vld [vmem:[#allocation5 + $0xf8] sm:$0xff]
    %v98 = vld [vmem:[#allocation5 + $0x100] sm:$0xff]
    %v99 = vld [vmem:[#allocation5 + $0x108] sm:$0xff]
    %v100 = vld [vmem:[#allocation5 + $0x110] sm:$0xff]
    %v101 = vld [vmem:[#allocation5 + $0x118] sm:$0xff]
    %v102 = vld [vmem:[#allocation5 + $0x120] sm:$0xff]
    %v103 = vld [vmem:[#allocation5 + $0x128] sm:$0xff]
    %v104 = vld [vmem:[#allocation5 + $0x130] sm:$0xff]
    %v105 = vld [vmem:[#allocation5 + $0x138] sm:$0xff]
    %v106 = vld [vmem:[#allocation5 + $0x140] sm:$0xff]
    %v107 = vld [vmem:[#allocation5 + $0x148] sm:$0xff]
    %v108 = vld [vmem:[#allocation5 + $0x150] sm:$0xff]
    %v109 = vld [vmem:[#allocation5 + $0x158] sm:$0xff]
    %v110 = vld [vmem:[#allocation5 + $0x160] sm:$0xff]
    %v111 = vld [vmem:[#allocation5 + $0x168] sm:$0xff]
    %v112 = vld [vmem:[#allocation5 + $0x170] sm:$0xff]
    %v113 = vld [vmem:[#allocation5 + $0x178] sm:$0xff]
    %v114 = vld [vmem:[#allocation5 + $0x180] sm:$0xff]
    %v115 = vld [vmem:[#allocation5 + $0x188] sm:$0xff]
    %v116 = vld [vmem:[#allocation5 + $0x190] sm:$0xff]
    %v117 = vld [vmem:[#allocation5 + $0x198] sm:$0xff]
    %v118 = vld [vmem:[#allocation5 + $0x1a0] sm:$0xff]
    %v119 = vld [vmem:[#allocation5 + $0x1a8] sm:$0xff]
    %v120 = vld [vmem:[#allocation5 + $0x1b0] sm:$0xff]
    %v121 = vld [vmem:[#allocation5 + $0x1b8] sm:$0xff]
    %v122 = vld [vmem:[#allocation5 + $0x1c0] sm:$0xff]
    %v123 = vld [vmem:[#allocation5 + $0x1c8] sm:$0xff]
    %v124 = vld [vmem:[#allocation5 + $0x1d0] sm:$0xff]
    %v125 = vld [vmem:[#allocation5 + $0x1d8] sm:$0xff]
    %v126 = vld [vmem:[#allocation5 + $0x1e0] sm:$0xff]
    %v127 = vld [vmem:[#allocation5 + $0x1e8] sm:$0xff]
    %v128 = vld [vmem:[#allocation5 + $0x1f0] sm:$0xff]
    %v129 = vld [vmem:[#allocation5 + $0x1f8] sm:$0xff]
    %v130 = vld [vmem:[%s2] sm:$0x3]
    %v132 = vlaneseq
    %v133 = vshrl.u32 %v132, 7
    %v134 = vsub.s32 0, %v133
    %v135 = vrot.slane %v130, %v134
    %v136 = vlaneseq
    %v137 = vshrl.u32 %v136, 7
    %v138 = vsub.s32 1, %v137
    %v139 = vrot.slane %v130, %v138
    %142 = vmatprep.subr.mxu0 %v67
    %143 = vmatpush1.msra.mxu0 %v66
    %144 = vmatprep.subr.mxu0 %v69
    %145 = vmatpush1.msra.mxu0 %v68
    %146 = vmatprep.subr.mxu0 %v71
    %147 = vmatpush1.msra.mxu0 %v70
    %148 = vmatprep.subr.mxu0 %v73
    %149 = vmatpush1.msra.mxu0 %v72
    %150 = vmatprep.subr.mxu0 %v75
    %151 = vmatpush1.msra.mxu0 %v74
    %152 = vmatprep.subr.mxu0 %v77
    %153 = vmatpush1.msra.mxu0 %v76
    %154 = vmatprep.subr.mxu0 %v79
    %155 = vmatpush1.msra.mxu0 %v78
    %156 = vmatprep.subr.mxu0 %v81
    %157 = vmatpush1.msra.mxu0 %v80
    %158 = vmatprep.subr.mxu0 %v83
    %159 = vmatpush1.msra.mxu0 %v82
    %160 = vmatprep.subr.mxu0 %v85
    %161 = vmatpush1.msra.mxu0 %v84
    %162 = vmatprep.subr.mxu0 %v87
    %163 = vmatpush1.msra.mxu0 %v86
    %164 = vmatprep.subr.mxu0 %v89
    %165 = vmatpush1.msra.mxu0 %v88
    %166 = vmatprep.subr.mxu0 %v91
    %167 = vmatpush1.msra.mxu0 %v90
    %168 = vmatprep.subr.mxu0 %v93
    %169 = vmatpush1.msra.mxu0 %v92
    %170 = vmatprep.subr.mxu0 %v95
    %171 = vmatpush1.msra.mxu0 %v94
    %172 = vmatprep.subr.mxu0 %v97
    %173 = vmatpush1.msra.mxu0 %v96
    %174 = vmatprep.subr.mxu0 %v99
    %175 = vmatpush1.msra.mxu0 %v98
    %176 = vmatprep.subr.mxu0 %v101
    %177 = vmatpush1.msra.mxu0 %v100
    %178 = vmatprep.subr.mxu0 %v103
    %179 = vmatpush1.msra.mxu0 %v102
    %180 = vmatprep.subr.mxu0 %v105
    %181 = vmatpush1.msra.mxu0 %v104
    %182 = vmatprep.subr.mxu0 %v107
    %183 = vmatpush1.msra.mxu0 %v106
    %184 = vmatprep.subr.mxu0 %v109
    %185 = vmatpush1.msra.mxu0 %v108
    %186 = vmatprep.subr.mxu0 %v111
    %187 = vmatpush1.msra.mxu0 %v110
    %188 = vmatprep.subr.mxu0 %v113
    %189 = vmatpush1.msra.mxu0 %v112
    %190 = vmatprep.subr.mxu0 %v115
    %191 = vmatpush1.msra.mxu0 %v114
    %192 = vmatprep.subr.mxu0 %v117
    %193 = vmatpush1.msra.mxu0 %v116
    %194 = vmatprep.subr.mxu0 %v119
    %195 = vmatpush1.msra.mxu0 %v118
    %196 = vmatprep.subr.mxu0 %v121
    %197 = vmatpush1.msra.mxu0 %v120
    %198 = vmatprep.subr.mxu0 %v123
    %199 = vmatpush1.msra.mxu0 %v122
    %200 = vmatprep.subr.mxu0 %v125
    %201 = vmatpush1.msra.mxu0 %v124
    %202 = vmatprep.subr.mxu0 %v127
    %203 = vmatpush1.msra.mxu0 %v126
    %204 = vmatprep.subr.mxu0 %v129
    %205 = vmatpush1.msra.mxu0 %v128
    %206 = vmatprep.mubr.f32.mxu0 %v63
    %207 = vmatmul.mubr.f32.gmra.mrb[0].mxu0 %v62
    %v208 = vpop.f32.mrb[0].mxu0
    %v209 = vadd.f32 %v135, %v208
    %v210 = vpop.f32.mrb[0].mxu0
    %v211 = vadd.f32 %v139, %v210
    %212 = vmatprep.mubr.f32.mxu0 %v65
    %213 = vmatmul.mubr.f32.gmra.mrb[0].mxu0 %v64
    %v214 = vpop.f32.mrb[0].mxu0
    %v215 = vadd.f32 %v135, %v214
    %v216 = vpop.f32.mrb[0].mxu0
    %v217 = vadd.f32 %v139, %v216
    %218 = vdwg.mxu0
    %v219 = vmax.f32 %v209, 0.0
    %v220 = vmax.f32 %v211, 0.0
    %v221 = vmax.f32 %v215, 0.0
    %v222 = vmax.f32 %v217, 0.0
    %v223 = vld [vmem:[#allocation7] sm:$0xff]
    %v224 = vld [vmem:[#allocation7 + $0x8] sm:$0xff]
    %v225 = vld [vmem:[#allocation7 + $0x10] sm:$0xff]
    %v226 = vld [vmem:[#allocation7 + $0x18] sm:$0xff]
    %v227 = vld [vmem:[#allocation7 + $0x20] sm:$0xff]
    %v228 = vld [vmem:[#allocation7 + $0x28] sm:$0xff]
    %v229 = vld [vmem:[#allocation7 + $0x30] sm:$0xff]
    %v230 = vld [vmem:[#allocation7 + $0x38] sm:$0xff]
    %v231 = vld [vmem:[#allocation7 + $0x40] sm:$0xff]
    %v232 = vld [vmem:[#allocation7 + $0x48] sm:$0xff]
    %v233 = vld [vmem:[#allocation7 + $0x50] sm:$0xff]
    %v234 = vld [vmem:[#allocation7 + $0x58] sm:$0xff]
    %v235 = vld [vmem:[#allocation7 + $0x60] sm:$0xff]
    %v236 = vld [vmem:[#allocation7 + $0x68] sm:$0xff]
    %v237 = vld [vmem:[#allocation7 + $0x70] sm:$0xff]
    %v238 = vld [vmem:[#allocation7 + $0x78] sm:$0xff]
    %v239 = vld [vmem:[#allocation7 + $0x80] sm:$0xff]
    %v240 = vld [vmem:[#allocation7 + $0x88] sm:$0xff]
    %v241 = vld [vmem:[#allocation7 + $0x90] sm:$0xff]
    %v242 = vld [vmem:[#allocation7 + $0x98] sm:$0xff]
    %v243 = vld [vmem:[#allocation7 + $0xa0] sm:$0xff]
    %v244 = vld [vmem:[#allocation7 + $0xa8] sm:$0xff]
    %v245 = vld [vmem:[#allocation7 + $0xb0] sm:$0xff]
    %v246 = vld [vmem:[#allocation7 + $0xb8] sm:$0xff]
    %v247 = vld [vmem:[#allocation7 + $0xc0] sm:$0xff]
    %v248 = vld [vmem:[#allocation7 + $0xc8] sm:$0xff]
    %v249 = vld [vmem:[#allocation7 + $0xd0] sm:$0xff]
    %v250 = vld [vmem:[#allocation7 + $0xd8] sm:$0xff]
    %v251 = vld [vmem:[#allocation7 + $0xe0] sm:$0xff]
    %v252 = vld [vmem:[#allocation7 + $0xe8] sm:$0xff]
    %v253 = vld [vmem:[#allocation7 + $0xf0] sm:$0xff]
    %v254 = vld [vmem:[#allocation7 + $0xf8] sm:$0xff]
    %v255 = vld [vmem:[#allocation7 + $0x100] sm:$0xff]
    %v256 = vld [vmem:[#allocation7 + $0x108] sm:$0xff]
    %v257 = vld [vmem:[#allocation7 + $0x110] sm:$0xff]
    %v258 = vld [vmem:[#allocation7 + $0x118] sm:$0xff]
    %v259 = vld [vmem:[#allocation7 + $0x120] sm:$0xff]
    %v260 = vld [vmem:[#allocation7 + $0x128] sm:$0xff]
    %v261 = vld [vmem:[#allocation7 + $0x130] sm:$0xff]
    %v262 = vld [vmem:[#allocation7 + $0x138] sm:$0xff]
    %v263 = vld [vmem:[#allocation7 + $0x140] sm:$0xff]
    %v264 = vld [vmem:[#allocation7 + $0x148] sm:$0xff]
    %v265 = vld [vmem:[#allocation7 + $0x150] sm:$0xff]
    %v266 = vld [vmem:[#allocation7 + $0x158] sm:$0xff]
    %v267 = vld [vmem:[#allocation7 + $0x160] sm:$0xff]
    %v268 = vld [vmem:[#allocation7 + $0x168] sm:$0xff]
    %v269 = vld [vmem:[#allocation7 + $0x170] sm:$0xff]
    %v270 = vld [vmem:[#allocation7 + $0x178] sm:$0xff]
    %v271 = vld [vmem:[#allocation7 + $0x180] sm:$0xff]
    %v272 = vld [vmem:[#allocation7 + $0x188] sm:$0xff]
    %v273 = vld [vmem:[#allocation7 + $0x190] sm:$0xff]
    %v274 = vld [vmem:[#allocation7 + $0x198] sm:$0xff]
    %v275 = vld [vmem:[#allocation7 + $0x1a0] sm:$0xff]
    %v276 = vld [vmem:[#allocation7 + $0x1a8] sm:$0xff]
    %v277 = vld [vmem:[#allocation7 + $0x1b0] sm:$0xff]
    %v278 = vld [vmem:[#allocation7 + $0x1b8] sm:$0xff]
    %v279 = vld [vmem:[#allocation7 + $0x1c0] sm:$0xff]
    %v280 = vld [vmem:[#allocation7 + $0x1c8] sm:$0xff]
    %v281 = vld [vmem:[#allocation7 + $0x1d0] sm:$0xff]
    %v282 = vld [vmem:[#allocation7 + $0x1d8] sm:$0xff]
    %v283 = vld [vmem:[#allocation7 + $0x1e0] sm:$0xff]
    %v284 = vld [vmem:[#allocation7 + $0x1e8] sm:$0xff]
    %v285 = vld [vmem:[#allocation7 + $0x1f0] sm:$0xff]
    %v286 = vld [vmem:[#allocation7 + $0x1f8] sm:$0xff]
    %v287 = vld [vmem:[%s4] sm:$0x3]
    %v289 = vlaneseq
    %v290 = vshrl.u32 %v289, 7
    %v291 = vsub.s32 0, %v290
    %v292 = vrot.slane %v287, %v291
    %v293 = vlaneseq
    %v294 = vshrl.u32 %v293, 7
    %v295 = vsub.s32 1, %v294
    %v296 = vrot.slane %v287, %v295
    %299 = vmatprep.subr.mxu0 %v224
    %300 = vmatpush1.msra.mxu0 %v223
    %301 = vmatprep.subr.mxu0 %v226
    %302 = vmatpush1.msra.mxu0 %v225
    %303 = vmatprep.subr.mxu0 %v228
    %304 = vmatpush1.msra.mxu0 %v227
    %305 = vmatprep.subr.mxu0 %v230
    %306 = vmatpush1.msra.mxu0 %v229
    %307 = vmatprep.subr.mxu0 %v232
    %308 = vmatpush1.msra.mxu0 %v231
    %309 = vmatprep.subr.mxu0 %v234
    %310 = vmatpush1.msra.mxu0 %v233
    %311 = vmatprep.subr.mxu0 %v236
    %312 = vmatpush1.msra.mxu0 %v235
    %313 = vmatprep.subr.mxu0 %v238
    %314 = vmatpush1.msra.mxu0 %v237
    %315 = vmatprep.subr.mxu0 %v240
    %316 = vmatpush1.msra.mxu0 %v239
    %317 = vmatprep.subr.mxu0 %v242
    %318 = vmatpush1.msra.mxu0 %v241
    %319 = vmatprep.subr.mxu0 %v244
    %320 = vmatpush1.msra.mxu0 %v243
    %321 = vmatprep.subr.mxu0 %v246
    %322 = vmatpush1.msra.mxu0 %v245
    %323 = vmatprep.subr.mxu0 %v248
    %324 = vmatpush1.msra.mxu0 %v247
    %325 = vmatprep.subr.mxu0 %v250
    %326 = vmatpush1.msra.mxu0 %v249
    %327 = vmatprep.subr.mxu0 %v252
    %328 = vmatpush1.msra.mxu0 %v251
    %329 = vmatprep.subr.mxu0 %v254
    %330 = vmatpush1.msra.mxu0 %v253
    %331 = vmatprep.subr.mxu0 %v256
    %332 = vmatpush1.msra.mxu0 %v255
    %333 = vmatprep.subr.mxu0 %v258
    %334 = vmatpush1.msra.mxu0 %v257
    %335 = vmatprep.subr.mxu0 %v260
    %336 = vmatpush1.msra.mxu0 %v259
    %337 = vmatprep.subr.mxu0 %v262
    %338 = vmatpush1.msra.mxu0 %v261
    %339 = vmatprep.subr.mxu0 %v264
    %340 = vmatpush1.msra.mxu0 %v263
    %341 = vmatprep.subr.mxu0 %v266
    %342 = vmatpush1.msra.mxu0 %v265
    %343 = vmatprep.subr.mxu0 %v268
    %344 = vmatpush1.msra.mxu0 %v267
    %345 = vmatprep.subr.mxu0 %v270
    %346 = vmatpush1.msra.mxu0 %v269
    %347 = vmatprep.subr.mxu0 %v272
    %348 = vmatpush1.msra.mxu0 %v271
    %349 = vmatprep.subr.mxu0 %v274
    %350 = vmatpush1.msra.mxu0 %v273
    %351 = vmatprep.subr.mxu0 %v276
    %352 = vmatpush1.msra.mxu0 %v275
    %353 = vmatprep.subr.mxu0 %v278
    %354 = vmatpush1.msra.mxu0 %v277
    %355 = vmatprep.subr.mxu0 %v280
    %356 = vmatpush1.msra.mxu0 %v279
    %357 = vmatprep.subr.mxu0 %v282
    %358 = vmatpush1.msra.mxu0 %v281
    %359 = vmatprep.subr.mxu0 %v284
    %360 = vmatpush1.msra.mxu0 %v283
    %361 = vmatprep.subr.mxu0 %v286
    %362 = vmatpush1.msra.mxu0 %v285
    %363 = vmatprep.mubr.f32.mxu0 %v220
    %364 = vmatmul.mubr.f32.gmra.mrb[0].mxu0 %v219
    %v365 = vpop.f32.mrb[0].mxu0
    %v366 = vadd.f32 %v292, %v365
    %v367 = vpop.f32.mrb[0].mxu0
    %v368 = vadd.f32 %v296, %v367
    %369 = vmatprep.mubr.f32.mxu0 %v222
    %370 = vmatmul.mubr.f32.gmra.mrb[0].mxu0 %v221
    %v371 = vpop.f32.mrb[0].mxu0
    %v372 = vadd.f32 %v292, %v371
    %v373 = vpop.f32.mrb[0].mxu0
    %v374 = vadd.f32 %v296, %v373
    %375 = vdwg.mxu0
    %376 = vst [vmem:[#allocation8] sm:$0xff] %v366
    %377 = vst [vmem:[#allocation8 + $0x8] sm:$0xff] %v368
    %378 = vst [vmem:[#allocation8 + $0x10] sm:$0xff] %v372
    %379 = vst [vmem:[#allocation8 + $0x18] sm:$0xff] %v374
    // Predicated region
    $region34: #{tpu_custom_call.1} parent=1 // pred_check
      _
    $region35: #{tpu_custom_call.1} parent=1 // pred_check_branch
      %381 = sbr.rel (0) target = $region37
    $region36: #{tpu_custom_call.1} parent=1 // pred_region
      %s383 = ssub.s32 512, 512
      %384 = vsyncadd [#allocation4], %s383
      %s385 = sshll.u32 [#allocation8], 4
      %s386 = int_to_ptr.vmem [resolvable:$true] %s385
      %391 = dma.vmem_to_hbm [thread:$0]  %s386, 512, %s5, [#allocation4], 256, 256, 16
    $region37: #{tpu_custom_call.1} parent=1 // pred_fallthru
      _
    // Predicated region
    $region38: #{tpu_custom_call.1} parent=1 // pred_check
      _
    $region39: #{tpu_custom_call.1} parent=1 // pred_check_branch
      %393 = sbr.rel (0) target = $region41
    $region40: #{tpu_custom_call.1} parent=1 // pred_region
      %394 = dma.done [#allocation4], 512
    $region41: #{tpu_custom_call.1} parent=1 // pred_fallthru
      _
    %395 = vsyncpa [#allocation3], 1
    %396 = vsyncpa [#allocation6], 1
    %397 = vsyncpa [#allocation4], 1

</llo_original>
